<compile_context>
chip_gen: v7x
topology: tpu7x:2x2x1
jax: 0.10.0
libtpu: 0.0.40
codegen_flags: <defaults>
</compile_context>

<pallas_src>
import functools

import jax
import jax.numpy as jnp
from jax.experimental import pallas as pl
from jax.experimental.pallas import tpu as pltpu


def _round_up(n, m):
    return ((n + m - 1) // m) * m


def _nbytes(a):
    return int(a.size) * a.dtype.itemsize


def _mlp_kernel(depth, compute_dtype, *refs):
    """Fused MLP kernel for one batch tile.

    refs = (x_ref, w0_ref, b0_ref, w1_ref, b1_ref, ..., o_ref)
    x tile is (TM, in_pad) f32; weights are (in_pad_i, out_pad_i) in
    compute_dtype (bf16 MXU feeds by default); biases are (1, out_pad_i) f32.
    """
    x_ref = refs[0]
    o_ref = refs[-1]
    param_refs = refs[1:-1]  # 2 * depth refs: (w, b) per layer

    h = x_ref[...]  # f32 activations throughout
    for i in range(depth):
        w = param_refs[2 * i][...]        # compute_dtype, resident in VMEM
        b = param_refs[2 * i + 1][...]    # f32, (1, out_pad)
        # MXU matmul with f32 accumulation; feeds in compute_dtype (bf16 fast path).
        acc = jnp.dot(h.astype(compute_dtype), w,
                      preferred_element_type=jnp.float32)
        h = acc + b                        # bias add in f32 (VPU)
        if i < depth - 1:
            # SiLU(x) = x * sigmoid(x); sigmoid lowers to the EUP, mul to the VPU.
            h = h * jax.nn.sigmoid(h)
    o_ref[...] = h.astype(o_ref.dtype)


def mlp_forward(x, weights, biases, *, tm=256, param_dtype=jnp.bfloat16):
    """Run the fused, batch-tiled MLP Pallas kernel.

    x:       (batch, in_dim)  float32
    weights: list of (in_i, out_i) float32  (transposed vs. PyTorch nn.Linear)
    biases:  list of (1, out_i) float32
    """
    depth = len(weights)
    batch, in_dim = x.shape
    out_dim = weights[-1].shape[1]

    # Feature dims padded to lane multiples (128) -> MXU-friendly matmuls and
    # lane-dense output stores.
    dims = [in_dim] + [w.shape[1] for w in weights]
    pdims = [_round_up(d, 128) for d in dims]

    # Batch tile: multiple of 8 (sublane), capped at tm; pad batch to a multiple.
    tm = max(8, min(tm, _round_up(batch, 8)))
    pbatch = _round_up(batch, tm)

    xp = jnp.zeros((pbatch, pdims[0]), jnp.float32).at[:batch, :in_dim].set(x)

    in_arrays = [xp]
    in_specs = [pl.BlockSpec((tm, pdims[0]), lambda i: (i, 0))]
    for li, (w, b) in enumerate(zip(weights, biases)):
        wp = jnp.zeros((pdims[li], pdims[li + 1]), param_dtype)
        wp = wp.at[:w.shape[0], :w.shape[1]].set(w.astype(param_dtype))
        bp = jnp.zeros((1, pdims[li + 1]), jnp.float32).at[:, :b.shape[1]].set(b)
        in_arrays.extend([wp, bp])
        # Weights/biases: full-array blocks, index_map ignores the batch index
        # -> DMA'd once, resident in VMEM for the whole grid.
        in_specs.append(pl.BlockSpec(wp.shape, lambda i: (0, 0)))
        in_specs.append(pl.BlockSpec(bp.shape, lambda i: (0, 0)))

    # VMEM budget: resident params + double-buffered x/out tiles + carried
    # activation working set, plus headroom.  Clamp to [32 MiB, 64 MiB] so it
    # is valid on every chip (v7x physical VMEM is 64 MiB).
    param_bytes = sum(_nbytes(a) for a in in_arrays[1:])
    io_bytes = 2 * tm * pdims[0] * 4 + 2 * tm * pdims[-1] * 4
    work_bytes = 2 * tm * max(pdims) * 4
    needed = param_bytes + io_bytes + work_bytes + (8 << 20)
    vmem_limit = int(min(64 * 1024 * 1024, max(32 * 1024 * 1024, needed)))
    # TODO(synk): if total bf16 weights ever exceed ~40 MiB, add a reduction
    # grid axis (K-tiling) with an f32 VMEM accumulator instead of keeping all
    # layers resident.

    kernel = functools.partial(_mlp_kernel, depth, param_dtype)

    out_padded = pl.pallas_call(
        kernel,
        out_shape=jax.ShapeDtypeStruct((pbatch, pdims[-1]), jnp.float32),
        grid=(pbatch // tm,),
        in_specs=in_specs,
        out_specs=pl.BlockSpec((tm, pdims[-1]), lambda i: (i, 0)),
        compiler_params=pltpu.CompilerParams(
            dimension_semantics=("parallel",),
            vmem_limit_bytes=vmem_limit,
        ),
    )(*in_arrays)

    return out_padded[:batch, :out_dim]


def init_mlp_params(key, shp):
    """Deterministic init matching nn.Linear shapes.

    PyTorch nn.Linear(in, out) has weight (out, in), bias (out,), both
    initialized U(-1/sqrt(in), 1/sqrt(in)).  We store weight transposed
    as (in, out) for the x @ W kernel layout.
    """
    weights, biases = [], []
    for i in range(len(shp) - 1):
        fan_in, fan_out = shp[i], shp[i + 1]
        bound = 1.0 / jnp.sqrt(jnp.float32(fan_in))
        key, kw, kb = jax.random.split(key, 3)
        w = jax.random.uniform(kw, (fan_in, fan_out), jnp.float32, -bound, bound)
        b = jax.random.uniform(kb, (1, fan_out), jnp.float32, -bound, bound)
        weights.append(w)
        biases.append(b)
    return key, weights, biases


def mlp_reference(x, weights, biases):
    """Pure-JAX reference of the PyTorch forward for correctness checking."""
    h = x
    depth = len(weights)
    for i in range(depth):
        h = h @ weights[i] + biases[i]
        if i < depth - 1:
            h = h * jax.nn.sigmoid(h)  # SiLU
    return h


if __name__ == "__main__":
    # Small shapes consistent with the module: shp = [in_dim, w, out_dim], depth=2.
    in_dim, hidden, out_dim = 16, 32, 16
    shp = [in_dim, hidden, out_dim]
    batch = 8

    key = jax.random.PRNGKey(0)
    key, weights, biases = init_mlp_params(key, shp)

    # Unused-by-forward `embedding` parameter (parity only, p=59 rows).
    key, ke, kx = jax.random.split(key, 3)
    embedding = jax.random.normal(ke, (59, in_dim), jnp.float32)
    del embedding  # never used in forward()

    x = jax.random.normal(kx, (batch, in_dim), jnp.float32)

    ref = mlp_reference(x, weights, biases)

    # f32 MXU-feed path: exact-precision check.
    out_f32 = jax.block_until_ready(
        mlp_forward(x, weights, biases, param_dtype=jnp.float32))
    assert out_f32.shape == (batch, out_dim)
    assert jnp.allclose(out_f32, ref, atol=1e-5, rtol=1e-5)

    # bf16 MXU-feed path (v6e/v7x fast path), f32 accumulation/activations.
    out_bf16 = jax.block_until_ready(
        mlp_forward(x, weights, biases, param_dtype=jnp.bfloat16))
    assert out_bf16.shape == (batch, out_dim)
    assert jnp.allclose(out_bf16, ref, atol=5e-2, rtol=5e-2)

    print("KERNEL_OK")
</pallas_src>

<mosaic_0001>
module attributes {stable_mosaic.version = 11 : i64} {
  func.func @_mlp_kernel(%arg0: i32, %arg1: memref<8x128xf32, #tpu.memory_space<vmem>>, %arg2: memref<128x128xf32, #tpu.memory_space<vmem>>, %arg3: memref<1x128xf32, #tpu.memory_space<vmem>>, %arg4: memref<128x128xf32, #tpu.memory_space<vmem>>, %arg5: memref<1x128xf32, #tpu.memory_space<vmem>>, %arg6: memref<8x128xf32, #tpu.memory_space<vmem>>) attributes {dimension_semantics = [#tpu.dimension_semantics<parallel>], iteration_bounds = array<i64: 1>, scalar_prefetch = 0 : i64, scratch_operands = 0 : i64, tpu.core_type = #tpu.core_type<tc>, window_params = [{transform_indices = @transform_0, window_bounds = array<i64: 8, 128>}, {pipeline_mode = #tpu.pipeline_mode<synchronous>, transform_indices = @transform_1, window_bounds = array<i64: 128, 128>}, {pipeline_mode = #tpu.pipeline_mode<synchronous>, transform_indices = @transform_2, window_bounds = array<i64: 1, 128>}, {pipeline_mode = #tpu.pipeline_mode<synchronous>, transform_indices = @transform_3, window_bounds = array<i64: 128, 128>}, {pipeline_mode = #tpu.pipeline_mode<synchronous>, transform_indices = @transform_4, window_bounds = array<i64: 1, 128>}, {transform_indices = @transform_5, window_bounds = array<i64: 8, 128>}]} {
    %c0 = arith.constant 0 : index
    %c0_0 = arith.constant 0 : index
    %0 = vector.load %arg1[%c0, %c0_0] : memref<8x128xf32, #tpu.memory_space<vmem>>, vector<8x128xf32>
    %c0_1 = arith.constant 0 : index
    %c0_2 = arith.constant 0 : index
    %1 = vector.load %arg2[%c0_1, %c0_2] : memref<128x128xf32, #tpu.memory_space<vmem>>, vector<128x128xf32>
    %c0_3 = arith.constant 0 : index
    %c0_4 = arith.constant 0 : index
    %2 = vector.load %arg3[%c0_3, %c0_4] : memref<1x128xf32, #tpu.memory_space<vmem>>, vector<1x128xf32>
    %cst = arith.constant dense<0.000000e+00> : vector<8x128xf32>
    %3 = tpu.matmul %0, %1, %cst {dimension_numbers = #tpu.dot_dimension_numbers<[1], [0], [0], [1], [0, 0, 1, 1], [], []>} : vector<8x128xf32>, vector<128x128xf32>, vector<8x128xf32> -> vector<8x128xf32>
    %4 = vector.broadcast %2 : vector<1x128xf32> to vector<8x128xf32>
    %5 = arith.addf %3, %4 : vector<8x128xf32>
    %6 = arith.negf %5 : vector<8x128xf32>
    %7 = math.exp %6 : vector<8x128xf32>
    %cst_5 = arith.constant 1.000000e+00 : f32
    %8 = vector.broadcast %cst_5 : f32 to vector<8x128xf32>
    %9 = arith.addf %8, %7 : vector<8x128xf32>
    %10 = arith.divf %8, %9 : vector<8x128xf32>
    %11 = arith.mulf %5, %10 : vector<8x128xf32>
    %c0_6 = arith.constant 0 : index
    %c0_7 = arith.constant 0 : index
    %12 = vector.load %arg4[%c0_6, %c0_7] : memref<128x128xf32, #tpu.memory_space<vmem>>, vector<128x128xf32>
    %c0_8 = arith.constant 0 : index
    %c0_9 = arith.constant 0 : index
    %13 = vector.load %arg5[%c0_8, %c0_9] : memref<1x128xf32, #tpu.memory_space<vmem>>, vector<1x128xf32>
    %cst_10 = arith.constant dense<0.000000e+00> : vector<8x128xf32>
    %14 = tpu.matmul %11, %12, %cst_10 {dimension_numbers = #tpu.dot_dimension_numbers<[1], [0], [0], [1], [0, 0, 1, 1], [], []>} : vector<8x128xf32>, vector<128x128xf32>, vector<8x128xf32> -> vector<8x128xf32>
    %15 = vector.broadcast %13 : vector<1x128xf32> to vector<8x128xf32>
    %16 = arith.addf %14, %15 : vector<8x128xf32>
    %c0_11 = arith.constant 0 : index
    %c0_12 = arith.constant 0 : index
    %17 = vector.load %arg6[%c0_11, %c0_12] : memref<8x128xf32, #tpu.memory_space<vmem>>, vector<8x128xf32>
    tpu.vector_store %arg6[%c0_11, %c0_12], %16 {strides = array<i32>} : memref<8x128xf32, #tpu.memory_space<vmem>>, vector<8x128xf32>,
    return
  }
  func.func @transform_0(%arg0: i32) -> (i32, i32) {
    %c0_i32 = arith.constant 0 : i32
    %c0_i32_0 = arith.constant 0 : i32
    return %arg0, %c0_i32 : i32, i32
  }
  func.func @transform_1(%arg0: i32) -> (i32, i32) {
    %c0_i32 = arith.constant 0 : i32
    %c0_i32_0 = arith.constant 0 : i32
    %c0_i32_1 = arith.constant 0 : i32
    return %c0_i32, %c0_i32_0 : i32, i32
  }
  func.func @transform_2(%arg0: i32) -> (i32, i32) {
    %c0_i32 = arith.constant 0 : i32
    %c0_i32_0 = arith.constant 0 : i32
    %c0_i32_1 = arith.constant 0 : i32
    return %c0_i32, %c0_i32_0 : i32, i32
  }
  func.func @transform_3(%arg0: i32) -> (i32, i32) {
    %c0_i32 = arith.constant 0 : i32
    %c0_i32_0 = arith.constant 0 : i32
    %c0_i32_1 = arith.constant 0 : i32
    return %c0_i32, %c0_i32_0 : i32, i32
  }
  func.func @transform_4(%arg0: i32) -> (i32, i32) {
    %c0_i32 = arith.constant 0 : i32
    %c0_i32_0 = arith.constant 0 : i32
    %c0_i32_1 = arith.constant 0 : i32
    return %c0_i32, %c0_i32_0 : i32, i32
  }
  func.func @transform_5(%arg0: i32) -> (i32, i32) {
    %c0_i32 = arith.constant 0 : i32
    %c0_i32_0 = arith.constant 0 : i32
    return %arg0, %c0_i32 : i32, i32
  }
}

</mosaic_0001>

<llo_original>
// kernel: tpu_custom_call.1
$region0: #{tpu_custom_call.1}
  #allocation0 [shape = 'u32[]', space=smem, size = 0x4, offset = 0x4, fixed_abs, tag = 'smem constant byte address 0x4 - core index']
  #allocation1 [shape = 'u32[144,128]{1,0:T(1,128)}', space=vmem, size = 0x12000, scoped, tag = 'internal scratch']
  %s0 = inlined_call_operand.hbm [shape: f32[8,128], index: 0, kind: input, shape index: {}]
  %s1 = inlined_call_operand.hbm [shape: f32[128,128], index: 1, kind: input, shape index: {}]
  %s2 = inlined_call_operand.vmem [shape: f32[1,128], index: 2, kind: input, shape index: {}]
  %s3 = inlined_call_operand.hbm [shape: f32[128,128], index: 3, kind: input, shape index: {}]
  %s4 = inlined_call_operand.vmem [shape: f32[1,128], index: 4, kind: input, shape index: {}]
  %s5 = inlined_call_operand.hbm [shape: f32[8,128], index: 5, kind: output, shape index: {}]
  %s6 = sld [smem:[#allocation0]]
  $region42: #{tpu_custom_call.1} parent=0
    _
  %s8 = ssub.s32 1, %s6
  %s9 = scalar_select 0, %s8, %s6
  $region1: #{tpu_custom_call.1} parent=0
    #allocation2 [shape = 'u8[4096]{0}', space=vmem, size = 0x1000, scoped, tag = 'input window, operand 0, single buffered']
    #allocation3 [shape = 's32[1]{0}', space=sflag, size = 0x4, scoped, tag = 'scoped memory for tpu_custom_call.1']
    #allocation4 [shape = 's32[1]{0}', space=sflag, size = 0x4, scoped, tag = 'scoped memory for tpu_custom_call.1']
    #allocation5 [shape = 'u8[65536]{0}', space=vmem, size = 0x10000, scoped, tag = 'input window, operand 1, single buffered']
    #allocation6 [shape = 's32[1]{0}', space=sflag, size = 0x4, scoped, tag = 'scoped memory for tpu_custom_call.1']
    #allocation7 [shape = 'u8[65536]{0}', space=vmem, size = 0x10000, scoped, tag = 'input window, operand 3, single buffered']
    #allocation8 [shape = 'u8[4096]{0}', space=vmem, size = 0x1000, scoped, tag = 'output window, operand 0, single buffered']
    %10 = vsyncpa [#allocation3], 0
    %11 = vsyncpa [#allocation6], 0
    %12 = vsyncpa [#allocation4], 0
    // Predicated region
    $region2: #{tpu_custom_call.1} parent=1 // pred_check
      _
    $region3: #{tpu_custom_call.1} parent=1 // pred_check_branch
      %14 = sbr.rel (0) target = $region5
    $region4: #{tpu_custom_call.1} parent=1 // pred_region
      %s16 = ssub.s32 128, 128
      %17 = vsyncadd [#allocation3], %s16
      %s19 = sshll.u32 [#allocation2], 4
      %s20 = int_to_ptr.vmem [resolvable:$true] %s19
      %22 = dma.hbm_to_vmem [thread:$0]  %s0, 128, %s20, [#allocation3]
    $region5: #{tpu_custom_call.1} parent=1 // pred_fallthru
      _
    // Predicated region
    $region6: #{tpu_custom_call.1} parent=1 // pred_check
      _
    $region7: #{tpu_custom_call.1} parent=1 // pred_check_branch
      %24 = sbr.rel (0) target = $region9
    $region8: #{tpu_custom_call.1} parent=1 // pred_region
      %s26 = ssub.s32 2048, 2048
      %27 = vsyncadd [#allocation6], %s26
      %s28 = sshll.u32 [#allocation5], 4
      %s29 = int_to_ptr.vmem [resolvable:$true] %s28
      %34 = dma.hbm_to_vmem [thread:$0]  %s1, 2048, %s29, [#allocation6], 128, 128, 8
    $region9: #{tpu_custom_call.1} parent=1 // pred_fallthru
      _
    // Predicated region
    $region10: #{tpu_custom_call.1} parent=1 // pred_check
      _
    $region11: #{tpu_custom_call.1} parent=1 // pred_check_branch
      %36 = sbr.rel (0) target = $region13
    $region12: #{tpu_custom_call.1} parent=1 // pred_region
      _
    $region13: #{tpu_custom_call.1} parent=1 // pred_fallthru
      _
    // Predicated region
    $region14: #{tpu_custom_call.1} parent=1 // pred_check
      _
    $region15: #{tpu_custom_call.1} parent=1 // pred_check_branch
      %38 = sbr.rel (0) target = $region17
    $region16: #{tpu_custom_call.1} parent=1 // pred_region
      %s40 = ssub.s32 2048, 2048
      %41 = vsyncadd [#allocation6], %s40
      %s42 = sshll.u32 [#allocation7], 4
      %s43 = int_to_ptr.vmem [resolvable:$true] %s42
      %48 = dma.hbm_to_vmem [thread:$0]  %s3, 2048, %s43, [#allocation6], 128, 128, 8
    $region17: #{tpu_custom_call.1} parent=1 // pred_fallthru
      _
    // Predicated region
    $region18: #{tpu_custom_call.1} parent=1 // pred_check
      _
    $region19: #{tpu_custom_call.1} parent=1 // pred_check_branch
      %50 = sbr.rel (0) target = $region21
    $region20: #{tpu_custom_call.1} parent=1 // pred_region
      _
    $region21: #{tpu_custom_call.1} parent=1 // pred_fallthru
      _
    // Predicated region
    $region22: #{tpu_custom_call.1} parent=1 // pred_check
      _
    $region23: #{tpu_custom_call.1} parent=1 // pred_check_branch
      %52 = sbr.rel (0) target = $region25
    $region24: #{tpu_custom_call.1} parent=1 // pred_region
      %53 = dma.done [#allocation3], 128
    $region25: #{tpu_custom_call.1} parent=1 // pred_fallthru
      _
    // Predicated region
    $region26: #{tpu_custom_call.1} parent=1 // pred_check
      _
    $region27: #{tpu_custom_call.1} parent=1 // pred_check_branch
      %55 = sbr.rel (0) target = $region29
    $region28: #{tpu_custom_call.1} parent=1 // pred_region
      %56 = dma.done [#allocation6], 2048
    $region29: #{tpu_custom_call.1} parent=1 // pred_fallthru
      _
    // Predicated region
    $region30: #{tpu_custom_call.1} parent=1 // pred_check
      _
    $region31: #{tpu_custom_call.1} parent=1 // pred_check_branch
      %58 = sbr.rel (0) target = $region33
    $region32: #{tpu_custom_call.1} parent=1 // pred_region
      %59 = dma.done [#allocation6], 2048
    $region33: #{tpu_custom_call.1} parent=1 // pred_fallthru
      _
    %v60 = vld [vmem:[#allocation2] sm:$0xff]
    %v61 = vld [vmem:[#allocation5] sm:$0xff]
    %v62 = vld [vmem:[#allocation5 + $0x8] sm:$0xff]
    %v63 = vld [vmem:[#allocation5 + $0x10] sm:$0xff]
    %v64 = vld [vmem:[#allocation5 + $0x18] sm:$0xff]
    %v65 = vld [vmem:[#allocation5 + $0x20] sm:$0xff]
    %v66 = vld [vmem:[#allocation5 + $0x28] sm:$0xff]
    %v67 = vld [vmem:[#allocation5 + $0x30] sm:$0xff]
    %v68 = vld [vmem:[#allocation5 + $0x38] sm:$0xff]
    %v69 = vld [vmem:[#allocation5 + $0x40] sm:$0xff]
    %v70 = vld [vmem:[#allocation5 + $0x48] sm:$0xff]
    %v71 = vld [vmem:[#allocation5 + $0x50] sm:$0xff]
    %v72 = vld [vmem:[#allocation5 + $0x58] sm:$0xff]
    %v73 = vld [vmem:[#allocation5 + $0x60] sm:$0xff]
    %v74 = vld [vmem:[#allocation5 + $0x68] sm:$0xff]
    %v75 = vld [vmem:[#allocation5 + $0x70] sm:$0xff]
    %v76 = vld [vmem:[#allocation5 + $0x78] sm:$0xff]
    %v77 = vld [vmem:[%s2] sm:$0x1]
    %v79 = vlaneseq
    %v80 = vshrl.u32 %v79, 7
    %v81 = vsub.s32 0, %v80
    %v82 = vrot.slane %v77, %v81
    %84 = vmatprep.subr.mxu0 0.0
    %85 = vmatpush1.msra.mxu0 %v61
    %86 = vmatprep.subr.mxu0 0.0
    %87 = vmatpush1.msra.mxu0 %v62
    %88 = vmatprep.subr.mxu0 0.0
    %89 = vmatpush1.msra.mxu0 %v63
    %90 = vmatprep.subr.mxu0 0.0
    %91 = vmatpush1.msra.mxu0 %v64
    %92 = vmatprep.subr.mxu0 0.0
    %93 = vmatpush1.msra.mxu0 %v65
    %94 = vmatprep.subr.mxu0 0.0
    %95 = vmatpush1.msra.mxu0 %v66
    %96 = vmatprep.subr.mxu0 0.0
    %97 = vmatpush1.msra.mxu0 %v67
    %98 = vmatprep.subr.mxu0 0.0
    %99 = vmatpush1.msra.mxu0 %v68
    %100 = vmatprep.subr.mxu0 0.0
    %101 = vmatpush1.msra.mxu0 %v69
    %102 = vmatprep.subr.mxu0 0.0
    %103 = vmatpush1.msra.mxu0 %v70
    %104 = vmatprep.subr.mxu0 0.0
    %105 = vmatpush1.msra.mxu0 %v71
    %106 = vmatprep.subr.mxu0 0.0
    %107 = vmatpush1.msra.mxu0 %v72
    %108 = vmatprep.subr.mxu0 0.0
    %109 = vmatpush1.msra.mxu0 %v73
    %110 = vmatprep.subr.mxu0 0.0
    %111 = vmatpush1.msra.mxu0 %v74
    %112 = vmatprep.subr.mxu0 0.0
    %113 = vmatpush1.msra.mxu0 %v75
    %114 = vmatprep.subr.mxu0 0.0
    %115 = vmatpush1.msra.mxu0 %v76
    %116 = vmatprep.subr.mxu0 0.0
    %117 = vmatpush1.msra.mxu0 0.0
    %118 = vmatprep.subr.mxu0 0.0
    %119 = vmatpush1.msra.mxu0 0.0
    %120 = vmatprep.subr.mxu0 0.0
    %121 = vmatpush1.msra.mxu0 0.0
    %122 = vmatprep.subr.mxu0 0.0
    %123 = vmatpush1.msra.mxu0 0.0
    %124 = vmatprep.subr.mxu0 0.0
    %125 = vmatpush1.msra.mxu0 0.0
    %126 = vmatprep.subr.mxu0 0.0
    %127 = vmatpush1.msra.mxu0 0.0
    %128 = vmatprep.subr.mxu0 0.0
    %129 = vmatpush1.msra.mxu0 0.0
    %130 = vmatprep.subr.mxu0 0.0
    %131 = vmatpush1.msra.mxu0 0.0
    %132 = vmatprep.subr.mxu0 0.0
    %133 = vmatpush1.msra.mxu0 0.0
    %134 = vmatprep.subr.mxu0 0.0
    %135 = vmatpush1.msra.mxu0 0.0
    %136 = vmatprep.subr.mxu0 0.0
    %137 = vmatpush1.msra.mxu0 0.0
    %138 = vmatprep.subr.mxu0 0.0
    %139 = vmatpush1.msra.mxu0 0.0
    %140 = vmatprep.subr.mxu0 0.0
    %141 = vmatpush1.msra.mxu0 0.0
    %142 = vmatprep.subr.mxu0 0.0
    %143 = vmatpush1.msra.mxu0 0.0
    %144 = vmatprep.subr.mxu0 0.0
    %145 = vmatpush1.msra.mxu0 0.0
    %146 = vmatprep.subr.mxu0 0.0
    %147 = vmatpush1.msra.mxu0 0.0
    %148 = vmatprep.mubr.f32.mxu0 0.0
    %149 = vmatmul.mubr.f32.gmra.mrb[0].mxu0 %v60
    %v150 = vpop.f32.mrb[0].mxu0
    %v151 = vadd.f32 %v82, %v150
    %v152 = vpop.f32.mrb[0].mxu0
    %153 = vdwg.mxu0
    %v154 = vxor.u32 %v151, 2147483648
    %v155 = vmul.f32 %v154, 1.442695
    %v156 = vpow.pop %v155
    %v157 = vadd.f32 %v156, 1.0
    %v158 = vrcp.pop %v157
    %v159 = vmul.f32 1.0, %v158
    %v160 = vmul.f32 %v151, %v159
    %v161 = vld [vmem:[#allocation7] sm:$0xff]
    %v162 = vld [vmem:[#allocation7 + $0x8] sm:$0xff]
    %v163 = vld [vmem:[#allocation7 + $0x10] sm:$0xff]
    %v164 = vld [vmem:[#allocation7 + $0x18] sm:$0xff]
    %v165 = vld [vmem:[#allocation7 + $0x20] sm:$0xff]
    %v166 = vld [vmem:[#allocation7 + $0x28] sm:$0xff]
    %v167 = vld [vmem:[#allocation7 + $0x30] sm:$0xff]
    %v168 = vld [vmem:[#allocation7 + $0x38] sm:$0xff]
    %v169 = vld [vmem:[#allocation7 + $0x40] sm:$0xff]
    %v170 = vld [vmem:[#allocation7 + $0x48] sm:$0xff]
    %v171 = vld [vmem:[#allocation7 + $0x50] sm:$0xff]
    %v172 = vld [vmem:[#allocation7 + $0x58] sm:$0xff]
    %v173 = vld [vmem:[#allocation7 + $0x60] sm:$0xff]
    %v174 = vld [vmem:[#allocation7 + $0x68] sm:$0xff]
    %v175 = vld [vmem:[#allocation7 + $0x70] sm:$0xff]
    %v176 = vld [vmem:[#allocation7 + $0x78] sm:$0xff]
    %v177 = vld [vmem:[%s4] sm:$0x1]
    %v179 = vlaneseq
    %v180 = vshrl.u32 %v179, 7
    %v181 = vsub.s32 0, %v180
    %v182 = vrot.slane %v177, %v181
    %184 = vmatprep.subr.mxu0 0.0
    %185 = vmatpush1.msra.mxu0 %v161
    %186 = vmatprep.subr.mxu0 0.0
    %187 = vmatpush1.msra.mxu0 %v162
    %188 = vmatprep.subr.mxu0 0.0
    %189 = vmatpush1.msra.mxu0 %v163
    %190 = vmatprep.subr.mxu0 0.0
    %191 = vmatpush1.msra.mxu0 %v164
    %192 = vmatprep.subr.mxu0 0.0
    %193 = vmatpush1.msra.mxu0 %v165
    %194 = vmatprep.subr.mxu0 0.0
    %195 = vmatpush1.msra.mxu0 %v166
    %196 = vmatprep.subr.mxu0 0.0
    %197 = vmatpush1.msra.mxu0 %v167
    %198 = vmatprep.subr.mxu0 0.0
    %199 = vmatpush1.msra.mxu0 %v168
    %200 = vmatprep.subr.mxu0 0.0
    %201 = vmatpush1.msra.mxu0 %v169
    %202 = vmatprep.subr.mxu0 0.0
    %203 = vmatpush1.msra.mxu0 %v170
    %204 = vmatprep.subr.mxu0 0.0
    %205 = vmatpush1.msra.mxu0 %v171
    %206 = vmatprep.subr.mxu0 0.0
    %207 = vmatpush1.msra.mxu0 %v172
    %208 = vmatprep.subr.mxu0 0.0
    %209 = vmatpush1.msra.mxu0 %v173
    %210 = vmatprep.subr.mxu0 0.0
    %211 = vmatpush1.msra.mxu0 %v174
    %212 = vmatprep.subr.mxu0 0.0
    %213 = vmatpush1.msra.mxu0 %v175
    %214 = vmatprep.subr.mxu0 0.0
    %215 = vmatpush1.msra.mxu0 %v176
    %216 = vmatprep.subr.mxu0 0.0
    %217 = vmatpush1.msra.mxu0 0.0
    %218 = vmatprep.subr.mxu0 0.0
    %219 = vmatpush1.msra.mxu0 0.0
    %220 = vmatprep.subr.mxu0 0.0
    %221 = vmatpush1.msra.mxu0 0.0
    %222 = vmatprep.subr.mxu0 0.0
    %223 = vmatpush1.msra.mxu0 0.0
    %224 = vmatprep.subr.mxu0 0.0
    %225 = vmatpush1.msra.mxu0 0.0
    %226 = vmatprep.subr.mxu0 0.0
    %227 = vmatpush1.msra.mxu0 0.0
    %228 = vmatprep.subr.mxu0 0.0
    %229 = vmatpush1.msra.mxu0 0.0
    %230 = vmatprep.subr.mxu0 0.0
    %231 = vmatpush1.msra.mxu0 0.0
    %232 = vmatprep.subr.mxu0 0.0
    %233 = vmatpush1.msra.mxu0 0.0
    %234 = vmatprep.subr.mxu0 0.0
    %235 = vmatpush1.msra.mxu0 0.0
    %236 = vmatprep.subr.mxu0 0.0
    %237 = vmatpush1.msra.mxu0 0.0
    %238 = vmatprep.subr.mxu0 0.0
    %239 = vmatpush1.msra.mxu0 0.0
    %240 = vmatprep.subr.mxu0 0.0
    %241 = vmatpush1.msra.mxu0 0.0
    %242 = vmatprep.subr.mxu0 0.0
    %243 = vmatpush1.msra.mxu0 0.0
    %244 = vmatprep.subr.mxu0 0.0
    %245 = vmatpush1.msra.mxu0 0.0
    %246 = vmatprep.subr.mxu0 0.0
    %247 = vmatpush1.msra.mxu0 0.0
    %248 = vmatprep.mubr.f32.mxu0 0.0
    %249 = vmatmul.mubr.f32.gmra.mrb[0].mxu0 %v160
    %v250 = vpop.f32.mrb[0].mxu0
    %v251 = vadd.f32 %v182, %v250
    %v252 = vpop.f32.mrb[0].mxu0
    %253 = vdwg.mxu0
    %254 = vst [vmem:[#allocation8] sm:$0xff] %v251
    // Predicated region
    $region34: #{tpu_custom_call.1} parent=1 // pred_check
      _
    $region35: #{tpu_custom_call.1} parent=1 // pred_check_branch
      %256 = sbr.rel (0) target = $region37
    $region36: #{tpu_custom_call.1} parent=1 // pred_region
      %s258 = ssub.s32 128, 128
      %259 = vsyncadd [#allocation4], %s258
      %s261 = sshll.u32 [#allocation8], 4
      %s262 = int_to_ptr.vmem [resolvable:$true] %s261
      %264 = dma.vmem_to_hbm [thread:$0]  %s262, 128, %s5, [#allocation4]
    $region37: #{tpu_custom_call.1} parent=1 // pred_fallthru
      _
    // Predicated region
    $region38: #{tpu_custom_call.1} parent=1 // pred_check
      _
    $region39: #{tpu_custom_call.1} parent=1 // pred_check_branch
      %266 = sbr.rel (0) target = $region41
    $region40: #{tpu_custom_call.1} parent=1 // pred_region
      %267 = dma.done [#allocation4], 128
    $region41: #{tpu_custom_call.1} parent=1 // pred_fallthru
      _
    %268 = vsyncpa [#allocation3], 1
    %269 = vsyncpa [#allocation6], 1
    %270 = vsyncpa [#allocation4], 1

</llo_original>
